<compile_context>
chip_gen: v7x
topology: tpu7x:2x2x1
jax: 0.10.0
libtpu: 0.0.40
codegen_flags: <defaults>
</compile_context>

<pallas_src>
import functools

import jax
import jax.numpy as jnp
from jax.experimental import pallas as pl
from jax.experimental.pallas import tpu as pltpu


def _round_up(x, m):
  return (x + m - 1) // m * m


# -----------------------------------------------------------------------------
# Fused kernel: 3 MLP subnets + affine coupling, all in VMEM.
# -----------------------------------------------------------------------------
def _inn_block_kernel(
    x_ref,                                   # (tm, Dp) fused [x1 | x2 | pad]
    wf1_ref, bf1_ref, wf2_ref, bf2_ref,      # f subnet
    wry1_ref, bry1_ref,                      # fused first layers of r & y
    wr2_ref, br2_ref, wy2_ref, by2_ref,      # second layers of r & y
    o_ref,                                   # (tm, Dp) fused [y1 | y2 | pad]
    *, d1, d2, hidden, d_pad, clamp, rev,
):
  x = x_ref[...]
  in_dt = x.dtype                   # matmul operand dtype (bf16 for perf runs)
  x1 = x[:, :d1]
  x2 = x[:, d1:d1 + d2]

  def f_net(z):
    # z is in matmul dtype; accumulation in f32.
    h = (jnp.dot(z, wf1_ref[...], preferred_element_type=jnp.float32)
         + bf1_ref[...].astype(jnp.float32))
    h = jnp.maximum(h, 0.0).astype(in_dt)
    return (jnp.dot(h, wf2_ref[...], preferred_element_type=jnp.float32)
            + bf2_ref[...].astype(jnp.float32))

  def ry_net(z):
    # r and y share the same input -> one fused first-layer matmul (N = 2*hidden).
    h = (jnp.dot(z, wry1_ref[...], preferred_element_type=jnp.float32)
         + bry1_ref[...].astype(jnp.float32))
    h = jnp.maximum(h, 0.0).astype(in_dt)
    s1 = (jnp.dot(h[:, :hidden], wr2_ref[...],
                  preferred_element_type=jnp.float32)
          + br2_ref[...].astype(jnp.float32))
    t1 = (jnp.dot(h[:, hidden:], wy2_ref[...],
                  preferred_element_type=jnp.float32)
          + by2_ref[...].astype(jnp.float32))
    return s1, t1

  def e(s, sign):
    # e(s) = exp(clamp * 2 * (sigmoid(s) - 0.5)); e(s)**-1 == e(-s) exactly.
    # Kept in f32 (v5e has no bf16 VPU/EUP); exp runs on the EUP slot.
    return jnp.exp(sign * (clamp * 2.0) * (jax.nn.sigmoid(s) - 0.5))

  if not rev:
    t2 = f_net(x2)                                          # (tm, d1) f32
    y1 = x1.astype(jnp.float32) + t2
    s1, t1 = ry_net(y1.astype(in_dt))                       # (tm, d2) each
    y2 = e(s1, 1.0) * x2.astype(jnp.float32) + t1
  else:
    s1, t1 = ry_net(x1)
    y2 = (x2.astype(jnp.float32) - t1) * e(s1, -1.0)        # no reciprocal
    t2 = f_net(y2.astype(in_dt))
    y1 = x1.astype(jnp.float32) - t2

  # Single lane-dense (multiple-of-128) store.
  parts = [y1.astype(o_ref.dtype), y2.astype(o_ref.dtype)]
  pad = d_pad - (d1 + d2)
  if pad > 0:
    parts.append(jnp.zeros((y1.shape[0], pad), o_ref.dtype))
  o_ref[...] = jnp.concatenate(parts, axis=-1)


# -----------------------------------------------------------------------------
# Wrapper
# -----------------------------------------------------------------------------
def inn_block_forward(x1, x2, params, *, clamp=0.2, rev=False, tm=512,
                      vmem_limit_bytes=48 * 1024 * 1024):
  """x1: (B, T, d_model - d_res), x2: (B, T, d_res) -> (y1, y2) same shapes.

  `tm` is the row tile (tune per chip: 256-2048; larger on v6e/v5e, keep the
  double-buffered slabs under ~24-28 MiB on v7x).  `vmem_limit_bytes` raises
  the scoped-VMEM budget (kept < 64 MiB so it is valid on v7x too).
  """
  B, T, d1 = x1.shape
  d2 = x2.shape[-1]
  M = B * T
  D = d1 + d2

  wf1, bf1, wf2, bf2 = params["f"]
  wr1, br1, wr2, br2 = params["r"]
  wy1, by1, wy2, by2 = params["y"]
  hidden = wr1.shape[1]

  # Fuse the shared-input first layers of r and y into one wider matmul.
  wry1 = jnp.concatenate([wr1, wy1], axis=1)        # (d1, 2*hidden)
  bry1 = jnp.concatenate([br1, by1], axis=1)        # (1, 2*hidden)

  # Lane-dense fused activation slab: [x1 | x2 | 0-pad], last dim multiple of 128.
  d_pad = _round_up(D, 128)
  tm_eff = min(tm, _round_up(M, 8))                 # never bigger than the data
  m_pad = _round_up(M, tm_eff)

  x = jnp.concatenate([x1.reshape(M, d1), x2.reshape(M, d2)], axis=-1)
  if m_pad > M or d_pad > D:
    x = jnp.pad(x, ((0, m_pad - M), (0, d_pad - D)))

  kernel = functools.partial(
      _inn_block_kernel, d1=d1, d2=d2, hidden=hidden, d_pad=d_pad,
      clamp=float(clamp), rev=bool(rev))

  def full_spec(a):                                  # weights: resident in VMEM
    return pl.BlockSpec(a.shape, lambda i: (0,) * a.ndim)

  row_spec = pl.BlockSpec((tm_eff, d_pad), lambda i: (i, 0))

  out = pl.pallas_call(
      kernel,
      out_shape=jax.ShapeDtypeStruct((m_pad, d_pad), x1.dtype),
      grid_spec=pltpu.PrefetchScalarGridSpec(
          num_scalar_prefetch=0,
          grid=(m_pad // tm_eff,),
          in_specs=[
              row_spec,
              full_spec(wf1), full_spec(bf1), full_spec(wf2), full_spec(bf2),
              full_spec(wry1), full_spec(bry1),
              full_spec(wr2), full_spec(br2), full_spec(wy2), full_spec(by2),
          ],
          out_specs=row_spec,
      ),
      compiler_params=pltpu.CompilerParams(
          dimension_semantics=("parallel",),
          vmem_limit_bytes=vmem_limit_bytes),
  )(x, wf1, bf1, wf2, bf2, wry1, bry1, wr2, br2, wy2, by2)

  y1 = out[:M, :d1].reshape(B, T, d1)
  y2 = out[:M, d1:D].reshape(B, T, d2)
  return y1, y2


# -----------------------------------------------------------------------------
# Pure-JAX reference (for correctness check)
# -----------------------------------------------------------------------------
def _ref_forward(x1, x2, params, clamp=0.2, rev=False):
  def mlp(x, p):
    w1, b1, w2, b2 = p
    h = jnp.maximum(x @ w1 + b1, 0.0)
    return h @ w2 + b2

  def e(s):
    return jnp.exp(clamp * 2.0 * (jax.nn.sigmoid(s) - 0.5))

  if not rev:
    t2 = mlp(x2, params["f"])
    y1 = x1 + t2
    s1, t1 = mlp(y1, params["r"]), mlp(y1, params["y"])
    y2 = e(s1) * x2 + t1
  else:
    s1, t1 = mlp(x1, params["r"]), mlp(x1, params["y"])
    y2 = (x2 - t1) / e(s1)
    t2 = mlp(y2, params["f"])
    y1 = x1 - t2
  return y1, y2


def _init_mlp_params(key, d_in, d_out, hidden, dtype=jnp.float32):
  k1, k2 = jax.random.split(key)
  w1 = jax.random.normal(k1, (d_in, hidden), dtype) * (1.0 / jnp.sqrt(d_in))
  b1 = jnp.zeros((1, hidden), dtype)
  w2 = jax.random.normal(k2, (hidden, d_out), dtype) * (1.0 / jnp.sqrt(hidden))
  b2 = jnp.zeros((1, d_out), dtype)
  return (w1, b1, w2, b2)


if __name__ == "__main__":
  # Small deterministic config: d_model=32, d_res=16 -> x1:(B,T,16), x2:(B,T,16)
  B, T = 2, 8
  d_model, d_res, hidden = 32, 16, 32
  d1 = d_model - d_res
  clamp = 0.2

  key = jax.random.PRNGKey(0)
  kx1, kx2, kf, kr, ky = jax.random.split(key, 5)

  x1 = jax.random.normal(kx1, (B, T, d1), jnp.float32)
  x2 = jax.random.normal(kx2, (B, T, d_res), jnp.float32)

  params = {
      # f: d_res -> d_model - d_res   (flag=False in the PyTorch module)
      "f": _init_mlp_params(kf, d_res, d1, hidden),
      # r, y: d_model - d_res -> d_res (flag=True)
      "r": _init_mlp_params(kr, d1, d_res, hidden),
      "y": _init_mlp_params(ky, d1, d_res, hidden),
  }

  # ---------------- float32 correctness path --------------------------------
  y1, y2 = inn_block_forward(x1, x2, params, clamp=clamp, rev=False)
  jax.block_until_ready((y1, y2))

  y1_ref, y2_ref = _ref_forward(x1, x2, params, clamp=clamp, rev=False)
  assert jnp.allclose(y1, y1_ref, atol=1e-5, rtol=1e-5)
  assert jnp.allclose(y2, y2_ref, atol=1e-5, rtol=1e-5)

  # Reverse pass should invert the forward pass
  x1_rec, x2_rec = inn_block_forward(y1, y2, params, clamp=clamp, rev=True)
  jax.block_until_ready((x1_rec, x2_rec))
  assert jnp.allclose(x1_rec, x1, atol=1e-4, rtol=1e-4)
  assert jnp.allclose(x2_rec, x2, atol=1e-4, rtol=1e-4)

  # ---------------- bfloat16 I/O perf path -----------------------------------
  # bf16 operands hit the MXU at full rate and halve HBM traffic; nonlinear
  # math stays f32 inside the kernel.
  to_bf16 = lambda t: jax.tree_util.tree_map(
      lambda a: a.astype(jnp.bfloat16), t)
  x1_b, x2_b, params_b = to_bf16(x1), to_bf16(x2), to_bf16(params)
  y1_b, y2_b = inn_block_forward(x1_b, x2_b, params_b, clamp=clamp, rev=False)
  jax.block_until_ready((y1_b, y2_b))
  assert jnp.allclose(y1_b.astype(jnp.float32), y1_ref, atol=2e-1, rtol=5e-2)
  assert jnp.allclose(y2_b.astype(jnp.float32), y2_ref, atol=2e-1, rtol=5e-2)

  print("KERNEL_OK")
</pallas_src>

<mosaic_0001>
module attributes {stable_mosaic.version = 11 : i64} {
  func.func @_inn_block_kernel(%arg0: i32, %arg1: memref<16x128xf32, #tpu.memory_space<vmem>>, %arg2: memref<16x32xf32, #tpu.memory_space<vmem>>, %arg3: memref<1x32xf32, #tpu.memory_space<vmem>>, %arg4: memref<32x16xf32, #tpu.memory_space<vmem>>, %arg5: memref<1x16xf32, #tpu.memory_space<vmem>>, %arg6: memref<16x64xf32, #tpu.memory_space<vmem>>, %arg7: memref<1x64xf32, #tpu.memory_space<vmem>>, %arg8: memref<32x16xf32, #tpu.memory_space<vmem>>, %arg9: memref<1x16xf32, #tpu.memory_space<vmem>>, %arg10: memref<32x16xf32, #tpu.memory_space<vmem>>, %arg11: memref<1x16xf32, #tpu.memory_space<vmem>>, %arg12: memref<16x128xf32, #tpu.memory_space<vmem>>) attributes {dimension_semantics = [#tpu.dimension_semantics<parallel>], iteration_bounds = array<i64: 1>, scalar_prefetch = 0 : i64, scratch_operands = 0 : i64, tpu.core_type = #tpu.core_type<tc>, window_params = [{transform_indices = @transform_0, window_bounds = array<i64: 16, 128>}, {pipeline_mode = #tpu.pipeline_mode<synchronous>, transform_indices = @transform_1, window_bounds = array<i64: 16, 32>}, {pipeline_mode = #tpu.pipeline_mode<synchronous>, transform_indices = @transform_2, window_bounds = array<i64: 1, 32>}, {pipeline_mode = #tpu.pipeline_mode<synchronous>, transform_indices = @transform_3, window_bounds = array<i64: 32, 16>}, {pipeline_mode = #tpu.pipeline_mode<synchronous>, transform_indices = @transform_4, window_bounds = array<i64: 1, 16>}, {pipeline_mode = #tpu.pipeline_mode<synchronous>, transform_indices = @transform_5, window_bounds = array<i64: 16, 64>}, {pipeline_mode = #tpu.pipeline_mode<synchronous>, transform_indices = @transform_6, window_bounds = array<i64: 1, 64>}, {pipeline_mode = #tpu.pipeline_mode<synchronous>, transform_indices = @transform_7, window_bounds = array<i64: 32, 16>}, {pipeline_mode = #tpu.pipeline_mode<synchronous>, transform_indices = @transform_8, window_bounds = array<i64: 1, 16>}, {pipeline_mode = #tpu.pipeline_mode<synchronous>, transform_indices = @transform_9, window_bounds = array<i64: 32, 16>}, {pipeline_mode = #tpu.pipeline_mode<synchronous>, transform_indices = @transform_10, window_bounds = array<i64: 1, 16>}, {transform_indices = @transform_11, window_bounds = array<i64: 16, 128>}]} {
    %c0 = arith.constant 0 : index
    %c0_0 = arith.constant 0 : index
    %0 = vector.load %arg1[%c0, %c0_0] : memref<16x128xf32, #tpu.memory_space<vmem>>, vector<16x128xf32>
    %1 = vector.extract_strided_slice %0 {offsets = [0, 0], sizes = [16, 16], strides = [1, 1]} : vector<16x128xf32> to vector<16x16xf32>
    %2 = vector.extract_strided_slice %0 {offsets = [0, 16], sizes = [16, 16], strides = [1, 1]} : vector<16x128xf32> to vector<16x16xf32>
    %c0_1 = arith.constant 0 : index
    %c0_2 = arith.constant 0 : index
    %3 = vector.load %arg2[%c0_1, %c0_2] : memref<16x32xf32, #tpu.memory_space<vmem>>, vector<16x32xf32>
    %cst = arith.constant dense<0.000000e+00> : vector<16x32xf32>
    %4 = tpu.matmul %2, %3, %cst {dimension_numbers = #tpu.dot_dimension_numbers<[1], [0], [0], [1], [0, 0, 1, 1], [], []>} : vector<16x16xf32>, vector<16x32xf32>, vector<16x32xf32> -> vector<16x32xf32>
    %c0_3 = arith.constant 0 : index
    %c0_4 = arith.constant 0 : index
    %5 = vector.load %arg3[%c0_3, %c0_4] : memref<1x32xf32, #tpu.memory_space<vmem>>, vector<1x32xf32>
    %6 = vector.broadcast %5 : vector<1x32xf32> to vector<16x32xf32>
    %7 = arith.addf %4, %6 : vector<16x32xf32>
    %cst_5 = arith.constant 0.000000e+00 : f32
    %8 = vector.broadcast %cst_5 : f32 to vector<16x32xf32>
    %9 = arith.maximumf %7, %8 : vector<16x32xf32>
    %c0_6 = arith.constant 0 : index
    %c0_7 = arith.constant 0 : index
    %10 = vector.load %arg4[%c0_6, %c0_7] : memref<32x16xf32, #tpu.memory_space<vmem>>, vector<32x16xf32>
    %cst_8 = arith.constant dense<0.000000e+00> : vector<16x16xf32>
    %11 = tpu.matmul %9, %10, %cst_8 {dimension_numbers = #tpu.dot_dimension_numbers<[1], [0], [0], [1], [0, 0, 1, 1], [], []>} : vector<16x32xf32>, vector<32x16xf32>, vector<16x16xf32> -> vector<16x16xf32>
    %c0_9 = arith.constant 0 : index
    %c0_10 = arith.constant 0 : index
    %12 = vector.load %arg5[%c0_9, %c0_10] : memref<1x16xf32, #tpu.memory_space<vmem>>, vector<1x16xf32>
    %13 = vector.broadcast %12 : vector<1x16xf32> to vector<16x16xf32>
    %14 = arith.addf %11, %13 : vector<16x16xf32>
    %15 = arith.addf %1, %14 : vector<16x16xf32>
    %c0_11 = arith.constant 0 : index
    %c0_12 = arith.constant 0 : index
    %16 = vector.load %arg6[%c0_11, %c0_12] : memref<16x64xf32, #tpu.memory_space<vmem>>, vector<16x64xf32>
    %cst_13 = arith.constant dense<0.000000e+00> : vector<16x64xf32>
    %17 = tpu.matmul %15, %16, %cst_13 {dimension_numbers = #tpu.dot_dimension_numbers<[1], [0], [0], [1], [0, 0, 1, 1], [], []>} : vector<16x16xf32>, vector<16x64xf32>, vector<16x64xf32> -> vector<16x64xf32>
    %c0_14 = arith.constant 0 : index
    %c0_15 = arith.constant 0 : index
    %18 = vector.load %arg7[%c0_14, %c0_15] : memref<1x64xf32, #tpu.memory_space<vmem>>, vector<1x64xf32>
    %19 = vector.broadcast %18 : vector<1x64xf32> to vector<16x64xf32>
    %20 = arith.addf %17, %19 : vector<16x64xf32>
    %cst_16 = arith.constant 0.000000e+00 : f32
    %21 = vector.broadcast %cst_16 : f32 to vector<16x64xf32>
    %22 = arith.maximumf %20, %21 : vector<16x64xf32>
    %23 = vector.extract_strided_slice %22 {offsets = [0, 0], sizes = [16, 32], strides = [1, 1]} : vector<16x64xf32> to vector<16x32xf32>
    %c0_17 = arith.constant 0 : index
    %c0_18 = arith.constant 0 : index
    %24 = vector.load %arg8[%c0_17, %c0_18] : memref<32x16xf32, #tpu.memory_space<vmem>>, vector<32x16xf32>
    %cst_19 = arith.constant dense<0.000000e+00> : vector<16x16xf32>
    %25 = tpu.matmul %23, %24, %cst_19 {dimension_numbers = #tpu.dot_dimension_numbers<[1], [0], [0], [1], [0, 0, 1, 1], [], []>} : vector<16x32xf32>, vector<32x16xf32>, vector<16x16xf32> -> vector<16x16xf32>
    %c0_20 = arith.constant 0 : index
    %c0_21 = arith.constant 0 : index
    %26 = vector.load %arg9[%c0_20, %c0_21] : memref<1x16xf32, #tpu.memory_space<vmem>>, vector<1x16xf32>
    %27 = vector.broadcast %26 : vector<1x16xf32> to vector<16x16xf32>
    %28 = arith.addf %25, %27 : vector<16x16xf32>
    %29 = vector.extract_strided_slice %22 {offsets = [0, 32], sizes = [16, 32], strides = [1, 1]} : vector<16x64xf32> to vector<16x32xf32>
    %c0_22 = arith.constant 0 : index
    %c0_23 = arith.constant 0 : index
    %30 = vector.load %arg10[%c0_22, %c0_23] : memref<32x16xf32, #tpu.memory_space<vmem>>, vector<32x16xf32>
    %cst_24 = arith.constant dense<0.000000e+00> : vector<16x16xf32>
    %31 = tpu.matmul %29, %30, %cst_24 {dimension_numbers = #tpu.dot_dimension_numbers<[1], [0], [0], [1], [0, 0, 1, 1], [], []>} : vector<16x32xf32>, vector<32x16xf32>, vector<16x16xf32> -> vector<16x16xf32>
    %c0_25 = arith.constant 0 : index
    %c0_26 = arith.constant 0 : index
    %32 = vector.load %arg11[%c0_25, %c0_26] : memref<1x16xf32, #tpu.memory_space<vmem>>, vector<1x16xf32>
    %33 = vector.broadcast %32 : vector<1x16xf32> to vector<16x16xf32>
    %34 = arith.addf %31, %33 : vector<16x16xf32>
    %35 = arith.negf %28 : vector<16x16xf32>
    %36 = math.exp %35 : vector<16x16xf32>
    %cst_27 = arith.constant 1.000000e+00 : f32
    %37 = vector.broadcast %cst_27 : f32 to vector<16x16xf32>
    %38 = arith.addf %37, %36 : vector<16x16xf32>
    %39 = arith.divf %37, %38 : vector<16x16xf32>
    %cst_28 = arith.constant 5.000000e-01 : f32
    %40 = vector.broadcast %cst_28 : f32 to vector<16x16xf32>
    %41 = arith.subf %39, %40 : vector<16x16xf32>
    %cst_29 = arith.constant 4.000000e-01 : f32
    %42 = vector.broadcast %cst_29 : f32 to vector<16x16xf32>
    %43 = arith.mulf %42, %41 : vector<16x16xf32>
    %44 = math.exp %43 : vector<16x16xf32>
    %45 = arith.mulf %44, %2 : vector<16x16xf32>
    %46 = arith.addf %45, %34 : vector<16x16xf32>
    %cst_30 = arith.constant 0.000000e+00 : f32
    %47 = vector.broadcast %cst_30 : f32 to vector<16x96xf32>
    %48 = tpu.concatenate %15, %46, %47 in 1 : vector<16x16xf32>, vector<16x16xf32>, vector<16x96xf32> -> vector<16x128xf32>
    %c0_31 = arith.constant 0 : index
    %c0_32 = arith.constant 0 : index
    %49 = vector.load %arg12[%c0_31, %c0_32] : memref<16x128xf32, #tpu.memory_space<vmem>>, vector<16x128xf32>
    tpu.vector_store %arg12[%c0_31, %c0_32], %48 {strides = array<i32>} : memref<16x128xf32, #tpu.memory_space<vmem>>, vector<16x128xf32>,
    return
  }
  func.func @transform_0(%arg0: i32) -> (i32, i32) {
    %c0_i32 = arith.constant 0 : i32
    %c0_i32_0 = arith.constant 0 : i32
    return %arg0, %c0_i32 : i32, i32
  }
  func.func @transform_1(%arg0: i32) -> (i32, i32) {
    %c0_i32 = arith.constant 0 : i32
    %c0_i32_0 = arith.constant 0 : i32
    %c0_i32_1 = arith.constant 0 : i32
    return %c0_i32, %c0_i32_0 : i32, i32
  }
  func.func @transform_2(%arg0: i32) -> (i32, i32) {
    %c0_i32 = arith.constant 0 : i32
    %c0_i32_0 = arith.constant 0 : i32
    %c0_i32_1 = arith.constant 0 : i32
    return %c0_i32, %c0_i32_0 : i32, i32
  }
  func.func @transform_3(%arg0: i32) -> (i32, i32) {
    %c0_i32 = arith.constant 0 : i32
    %c0_i32_0 = arith.constant 0 : i32
    %c0_i32_1 = arith.constant 0 : i32
    return %c0_i32, %c0_i32_0 : i32, i32
  }
  func.func @transform_4(%arg0: i32) -> (i32, i32) {
    %c0_i32 = arith.constant 0 : i32
    %c0_i32_0 = arith.constant 0 : i32
    %c0_i32_1 = arith.constant 0 : i32
    return %c0_i32, %c0_i32_0 : i32, i32
  }
  func.func @transform_5(%arg0: i32) -> (i32, i32) {
    %c0_i32 = arith.constant 0 : i32
    %c0_i32_0 = arith.constant 0 : i32
    %c0_i32_1 = arith.constant 0 : i32
    return %c0_i32, %c0_i32_0 : i32, i32
  }
  func.func @transform_6(%arg0: i32) -> (i32, i32) {
    %c0_i32 = arith.constant 0 : i32
    %c0_i32_0 = arith.constant 0 : i32
    %c0_i32_1 = arith.constant 0 : i32
    return %c0_i32, %c0_i32_0 : i32, i32
  }
  func.func @transform_7(%arg0: i32) -> (i32, i32) {
    %c0_i32 = arith.constant 0 : i32
    %c0_i32_0 = arith.constant 0 : i32
    %c0_i32_1 = arith.constant 0 : i32
    return %c0_i32, %c0_i32_0 : i32, i32
  }
  func.func @transform_8(%arg0: i32) -> (i32, i32) {
    %c0_i32 = arith.constant 0 : i32
    %c0_i32_0 = arith.constant 0 : i32
    %c0_i32_1 = arith.constant 0 : i32
    return %c0_i32, %c0_i32_0 : i32, i32
  }
  func.func @transform_9(%arg0: i32) -> (i32, i32) {
    %c0_i32 = arith.constant 0 : i32
    %c0_i32_0 = arith.constant 0 : i32
    %c0_i32_1 = arith.constant 0 : i32
    return %c0_i32, %c0_i32_0 : i32, i32
  }
  func.func @transform_10(%arg0: i32) -> (i32, i32) {
    %c0_i32 = arith.constant 0 : i32
    %c0_i32_0 = arith.constant 0 : i32
    %c0_i32_1 = arith.constant 0 : i32
    return %c0_i32, %c0_i32_0 : i32, i32
  }
  func.func @transform_11(%arg0: i32) -> (i32, i32) {
    %c0_i32 = arith.constant 0 : i32
    %c0_i32_0 = arith.constant 0 : i32
    return %arg0, %c0_i32 : i32, i32
  }
}

</mosaic_0001>

<llo_original>
// kernel: tpu_custom_call.1
$region0: #{tpu_custom_call.1}
  #allocation0 [shape = 'u32[]', space=smem, size = 0x4, offset = 0x4, fixed_abs, tag = 'smem constant byte address 0x4 - core index']
  #allocation1 [shape = 'u32[144,128]{1,0:T(1,128)}', space=vmem, size = 0x12000, scoped, tag = 'internal scratch']
  %s0 = inlined_call_operand.vmem [shape: f32[16,128], index: 0, kind: input, shape index: {}]
  %s1 = inlined_call_operand.vmem [shape: f32[16,32], index: 1, kind: input, shape index: {}]
  %s2 = inlined_call_operand.vmem [shape: f32[1,32], index: 2, kind: input, shape index: {}]
  %s3 = inlined_call_operand.vmem [shape: f32[32,16], index: 3, kind: input, shape index: {}]
  %s4 = inlined_call_operand.vmem [shape: f32[1,16], index: 4, kind: input, shape index: {}]
  %s5 = inlined_call_operand.vmem [shape: f32[16,64], index: 5, kind: input, shape index: {}]
  %s6 = inlined_call_operand.vmem [shape: f32[1,64], index: 6, kind: input, shape index: {}]
  %s7 = inlined_call_operand.vmem [shape: f32[32,16], index: 7, kind: input, shape index: {}]
  %s8 = inlined_call_operand.vmem [shape: f32[1,16], index: 8, kind: input, shape index: {}]
  %s9 = inlined_call_operand.vmem [shape: f32[32,16], index: 9, kind: input, shape index: {}]
  %s10 = inlined_call_operand.vmem [shape: f32[1,16], index: 10, kind: input, shape index: {}]
  %s11 = inlined_call_operand.hbm [shape: f32[16,128], index: 11, kind: output, shape index: {}]
  %s12 = sld [smem:[#allocation0]]
  $region54: #{tpu_custom_call.1} parent=0
    _
  %s14 = ssub.s32 1, %s12
  %s15 = scalar_select 0, %s14, %s12
  $region1: #{tpu_custom_call.1} parent=0
    #allocation2 [shape = 'u8[8192]{0}', space=vmem, size = 0x2000, scoped, tag = 'output window, operand 0, single buffered']
    #allocation3 [shape = 's32[1]{0}', space=sflag, size = 0x4, scoped, tag = 'scoped memory for tpu_custom_call.1']
    %16 = vsyncpa [#allocation3], 0
    // Predicated region
    $region2: #{tpu_custom_call.1} parent=1 // pred_check
      _
    $region3: #{tpu_custom_call.1} parent=1 // pred_check_branch
      %18 = sbr.rel (0) target = $region5
    $region4: #{tpu_custom_call.1} parent=1 // pred_region
      _
    $region5: #{tpu_custom_call.1} parent=1 // pred_fallthru
      _
    // Predicated region
    $region6: #{tpu_custom_call.1} parent=1 // pred_check
      _
    $region7: #{tpu_custom_call.1} parent=1 // pred_check_branch
      %20 = sbr.rel (0) target = $region9
    $region8: #{tpu_custom_call.1} parent=1 // pred_region
      _
    $region9: #{tpu_custom_call.1} parent=1 // pred_fallthru
      _
    // Predicated region
    $region10: #{tpu_custom_call.1} parent=1 // pred_check
      _
    $region11: #{tpu_custom_call.1} parent=1 // pred_check_branch
      %22 = sbr.rel (0) target = $region13
    $region12: #{tpu_custom_call.1} parent=1 // pred_region
      _
    $region13: #{tpu_custom_call.1} parent=1 // pred_fallthru
      _
    // Predicated region
    $region14: #{tpu_custom_call.1} parent=1 // pred_check
      _
    $region15: #{tpu_custom_call.1} parent=1 // pred_check_branch
      %24 = sbr.rel (0) target = $region17
    $region16: #{tpu_custom_call.1} parent=1 // pred_region
      _
    $region17: #{tpu_custom_call.1} parent=1 // pred_fallthru
      _
    // Predicated region
    $region18: #{tpu_custom_call.1} parent=1 // pred_check
      _
    $region19: #{tpu_custom_call.1} parent=1 // pred_check_branch
      %26 = sbr.rel (0) target = $region21
    $region20: #{tpu_custom_call.1} parent=1 // pred_region
      _
    $region21: #{tpu_custom_call.1} parent=1 // pred_fallthru
      _
    // Predicated region
    $region22: #{tpu_custom_call.1} parent=1 // pred_check
      _
    $region23: #{tpu_custom_call.1} parent=1 // pred_check_branch
      %28 = sbr.rel (0) target = $region25
    $region24: #{tpu_custom_call.1} parent=1 // pred_region
      _
    $region25: #{tpu_custom_call.1} parent=1 // pred_fallthru
      _
    // Predicated region
    $region26: #{tpu_custom_call.1} parent=1 // pred_check
      _
    $region27: #{tpu_custom_call.1} parent=1 // pred_check_branch
      %30 = sbr.rel (0) target = $region29
    $region28: #{tpu_custom_call.1} parent=1 // pred_region
      _
    $region29: #{tpu_custom_call.1} parent=1 // pred_fallthru
      _
    // Predicated region
    $region30: #{tpu_custom_call.1} parent=1 // pred_check
      _
    $region31: #{tpu_custom_call.1} parent=1 // pred_check_branch
      %32 = sbr.rel (0) target = $region33
    $region32: #{tpu_custom_call.1} parent=1 // pred_region
      _
    $region33: #{tpu_custom_call.1} parent=1 // pred_fallthru
      _
    // Predicated region
    $region34: #{tpu_custom_call.1} parent=1 // pred_check
      _
    $region35: #{tpu_custom_call.1} parent=1 // pred_check_branch
      %34 = sbr.rel (0) target = $region37
    $region36: #{tpu_custom_call.1} parent=1 // pred_region
      _
    $region37: #{tpu_custom_call.1} parent=1 // pred_fallthru
      _
    // Predicated region
    $region38: #{tpu_custom_call.1} parent=1 // pred_check
      _
    $region39: #{tpu_custom_call.1} parent=1 // pred_check_branch
      %36 = sbr.rel (0) target = $region41
    $region40: #{tpu_custom_call.1} parent=1 // pred_region
      _
    $region41: #{tpu_custom_call.1} parent=1 // pred_fallthru
      _
    // Predicated region
    $region42: #{tpu_custom_call.1} parent=1 // pred_check
      _
    $region43: #{tpu_custom_call.1} parent=1 // pred_check_branch
      %38 = sbr.rel (0) target = $region45
    $region44: #{tpu_custom_call.1} parent=1 // pred_region
      _
    $region45: #{tpu_custom_call.1} parent=1 // pred_fallthru
      _
    %v39 = vld [vmem:[%s0] sm:$0xff]
    %v40 = vld [vmem:[%s0 + $0x8] sm:$0xff]
    %v41 = vld [vmem:[%s1] sm:$0xff]
    %v42 = vld [vmem:[%s1 + $0x8] sm:$0xff]
    %v43 = vld [vmem:[%s2] sm:$0x1]
    %v45 = vlaneseq
    %v46 = vshrl.u32 %v45, 7
    %v47 = vsub.s32 0, %v46
    %v48 = vrot.slane %v43, %v47
    %52 = vrot.lane.b32.xlu0 %v39, 112
    %v53 = vpop.permute.xlu0 %52
    %54 = vrot.lane.b32.xlu0 %v40, 112
    %v55 = vpop.permute.xlu0 %54
    %vm56 = vcmask 130048
    %v57 = vsel %vm56, %v53, 0
    %v59 = vsel %vm56, %v55, 0
    %61 = vmatprep.subr.mxu0 0.0
    %62 = vmatpush1.msra.mxu0 %v41
    %63 = vmatprep.subr.mxu0 0.0
    %64 = vmatpush1.msra.mxu0 %v42
    %65 = vmatprep.subr.mxu0 0.0
    %66 = vmatpush1.msra.mxu0 0.0
    %67 = vmatprep.subr.mxu0 0.0
    %68 = vmatpush1.msra.mxu0 0.0
    %69 = vmatprep.subr.mxu0 0.0
    %70 = vmatpush1.msra.mxu0 0.0
    %71 = vmatprep.subr.mxu0 0.0
    %72 = vmatpush1.msra.mxu0 0.0
    %73 = vmatprep.subr.mxu0 0.0
    %74 = vmatpush1.msra.mxu0 0.0
    %75 = vmatprep.subr.mxu0 0.0
    %76 = vmatpush1.msra.mxu0 0.0
    %77 = vmatprep.subr.mxu0 0.0
    %78 = vmatpush1.msra.mxu0 0.0
    %79 = vmatprep.subr.mxu0 0.0
    %80 = vmatpush1.msra.mxu0 0.0
    %81 = vmatprep.subr.mxu0 0.0
    %82 = vmatpush1.msra.mxu0 0.0
    %83 = vmatprep.subr.mxu0 0.0
    %84 = vmatpush1.msra.mxu0 0.0
    %85 = vmatprep.subr.mxu0 0.0
    %86 = vmatpush1.msra.mxu0 0.0
    %87 = vmatprep.subr.mxu0 0.0
    %88 = vmatpush1.msra.mxu0 0.0
    %89 = vmatprep.subr.mxu0 0.0
    %90 = vmatpush1.msra.mxu0 0.0
    %91 = vmatprep.subr.mxu0 0.0
    %92 = vmatpush1.msra.mxu0 0.0
    %93 = vmatprep.subr.mxu0 0.0
    %94 = vmatpush1.msra.mxu0 0.0
    %95 = vmatprep.subr.mxu0 0.0
    %96 = vmatpush1.msra.mxu0 0.0
    %97 = vmatprep.subr.mxu0 0.0
    %98 = vmatpush1.msra.mxu0 0.0
    %99 = vmatprep.subr.mxu0 0.0
    %100 = vmatpush1.msra.mxu0 0.0
    %101 = vmatprep.subr.mxu0 0.0
    %102 = vmatpush1.msra.mxu0 0.0
    %103 = vmatprep.subr.mxu0 0.0
    %104 = vmatpush1.msra.mxu0 0.0
    %105 = vmatprep.subr.mxu0 0.0
    %106 = vmatpush1.msra.mxu0 0.0
    %107 = vmatprep.subr.mxu0 0.0
    %108 = vmatpush1.msra.mxu0 0.0
    %109 = vmatprep.subr.mxu0 0.0
    %110 = vmatpush1.msra.mxu0 0.0
    %111 = vmatprep.subr.mxu0 0.0
    %112 = vmatpush1.msra.mxu0 0.0
    %113 = vmatprep.subr.mxu0 0.0
    %114 = vmatpush1.msra.mxu0 0.0
    %115 = vmatprep.subr.mxu0 0.0
    %116 = vmatpush1.msra.mxu0 0.0
    %117 = vmatprep.subr.mxu0 0.0
    %118 = vmatpush1.msra.mxu0 0.0
    %119 = vmatprep.subr.mxu0 0.0
    %120 = vmatpush1.msra.mxu0 0.0
    %121 = vmatprep.subr.mxu0 0.0
    %122 = vmatpush1.msra.mxu0 0.0
    %123 = vmatprep.subr.mxu0 0.0
    %124 = vmatpush1.msra.mxu0 0.0
    %125 = vmatprep.mubr.f32.mxu0 0.0
    %126 = vmatmul.mubr.f32.gmra.mrb[0].mxu0 %v57
    %v127 = vpop.f32.mrb[0].mxu0
    %v128 = vadd.f32 %v48, %v127
    %v129 = vpop.f32.mrb[0].mxu0
    %130 = vmatprep.mubr.f32.mxu0 0.0
    %131 = vmatmul.mubr.f32.gmra.mrb[0].mxu0 %v59
    %v132 = vpop.f32.mrb[0].mxu0
    %v133 = vadd.f32 %v48, %v132
    %v134 = vpop.f32.mrb[0].mxu0
    %135 = vdwg.mxu0
    %v136 = vmax.f32 %v128, 0.0
    %v137 = vmax.f32 %v133, 0.0
    %v138 = vld [vmem:[%s3] sm:$0xff]
    %v139 = vld [vmem:[%s3 + $0x8] sm:$0xff]
    %v140 = vld [vmem:[%s3 + $0x10] sm:$0xff]
    %v141 = vld [vmem:[%s3 + $0x18] sm:$0xff]
    %v142 = vld [vmem:[%s4] sm:$0x1]
    %v144 = vlaneseq
    %v145 = vshrl.u32 %v144, 7
    %v146 = vsub.s32 0, %v145
    %v147 = vrot.slane %v142, %v146
    %vm149 = vcmask 261120
    %v151 = vsel %vm149, %v136, 0
    %v154 = vsel %vm149, %v137, 0
    %156 = vmatprep.subr.mxu0 0.0
    %157 = vmatpush1.msra.mxu0 %v138
    %158 = vmatprep.subr.mxu0 0.0
    %159 = vmatpush1.msra.mxu0 %v139
    %160 = vmatprep.subr.mxu0 0.0
    %161 = vmatpush1.msra.mxu0 %v140
    %162 = vmatprep.subr.mxu0 0.0
    %163 = vmatpush1.msra.mxu0 %v141
    %164 = vmatprep.subr.mxu0 0.0
    %165 = vmatpush1.msra.mxu0 0.0
    %166 = vmatprep.subr.mxu0 0.0
    %167 = vmatpush1.msra.mxu0 0.0
    %168 = vmatprep.subr.mxu0 0.0
    %169 = vmatpush1.msra.mxu0 0.0
    %170 = vmatprep.subr.mxu0 0.0
    %171 = vmatpush1.msra.mxu0 0.0
    %172 = vmatprep.subr.mxu0 0.0
    %173 = vmatpush1.msra.mxu0 0.0
    %174 = vmatprep.subr.mxu0 0.0
    %175 = vmatpush1.msra.mxu0 0.0
    %176 = vmatprep.subr.mxu0 0.0
    %177 = vmatpush1.msra.mxu0 0.0
    %178 = vmatprep.subr.mxu0 0.0
    %179 = vmatpush1.msra.mxu0 0.0
    %180 = vmatprep.subr.mxu0 0.0
    %181 = vmatpush1.msra.mxu0 0.0
    %182 = vmatprep.subr.mxu0 0.0
    %183 = vmatpush1.msra.mxu0 0.0
    %184 = vmatprep.subr.mxu0 0.0
    %185 = vmatpush1.msra.mxu0 0.0
    %186 = vmatprep.subr.mxu0 0.0
    %187 = vmatpush1.msra.mxu0 0.0
    %188 = vmatprep.subr.mxu0 0.0
    %189 = vmatpush1.msra.mxu0 0.0
    %190 = vmatprep.subr.mxu0 0.0
    %191 = vmatpush1.msra.mxu0 0.0
    %192 = vmatprep.subr.mxu0 0.0
    %193 = vmatpush1.msra.mxu0 0.0
    %194 = vmatprep.subr.mxu0 0.0
    %195 = vmatpush1.msra.mxu0 0.0
    %196 = vmatprep.subr.mxu0 0.0
    %197 = vmatpush1.msra.mxu0 0.0
    %198 = vmatprep.subr.mxu0 0.0
    %199 = vmatpush1.msra.mxu0 0.0
    %200 = vmatprep.subr.mxu0 0.0
    %201 = vmatpush1.msra.mxu0 0.0
    %202 = vmatprep.subr.mxu0 0.0
    %203 = vmatpush1.msra.mxu0 0.0
    %204 = vmatprep.subr.mxu0 0.0
    %205 = vmatpush1.msra.mxu0 0.0
    %206 = vmatprep.subr.mxu0 0.0
    %207 = vmatpush1.msra.mxu0 0.0
    %208 = vmatprep.subr.mxu0 0.0
    %209 = vmatpush1.msra.mxu0 0.0
    %210 = vmatprep.subr.mxu0 0.0
    %211 = vmatpush1.msra.mxu0 0.0
    %212 = vmatprep.subr.mxu0 0.0
    %213 = vmatpush1.msra.mxu0 0.0
    %214 = vmatprep.subr.mxu0 0.0
    %215 = vmatpush1.msra.mxu0 0.0
    %216 = vmatprep.subr.mxu0 0.0
    %217 = vmatpush1.msra.mxu0 0.0
    %218 = vmatprep.subr.mxu0 0.0
    %219 = vmatpush1.msra.mxu0 0.0
    %220 = vmatprep.mubr.f32.mxu0 0.0
    %221 = vmatmul.mubr.f32.gmra.mrb[0].mxu0 %v151
    %v222 = vpop.f32.mrb[0].mxu0
    %v223 = vadd.f32 %v147, %v222
    %v224 = vpop.f32.mrb[0].mxu0
    %225 = vmatprep.mubr.f32.mxu0 0.0
    %226 = vmatmul.mubr.f32.gmra.mrb[0].mxu0 %v154
    %v227 = vpop.f32.mrb[0].mxu0
    %v228 = vadd.f32 %v147, %v227
    %v229 = vpop.f32.mrb[0].mxu0
    %230 = vdwg.mxu0
    %v231 = vadd.f32 %v39, %v223
    %v232 = vadd.f32 %v40, %v228
    %v233 = vld [vmem:[%s5] sm:$0xff]
    %v234 = vld [vmem:[%s5 + $0x8] sm:$0xff]
    %v235 = vld [vmem:[%s6] sm:$0x1]
    %v237 = vlaneseq
    %v238 = vshrl.u32 %v237, 7
    %v239 = vsub.s32 0, %v238
    %v240 = vrot.slane %v235, %v239
    %v243 = vsel %vm56, %v231, 0
    %v246 = vsel %vm56, %v232, 0
    %248 = vmatprep.subr.mxu0 0.0
    %249 = vmatpush1.msra.mxu0 %v233
    %250 = vmatprep.subr.mxu0 0.0
    %251 = vmatpush1.msra.mxu0 %v234
    %252 = vmatprep.subr.mxu0 0.0
    %253 = vmatpush1.msra.mxu0 0.0
    %254 = vmatprep.subr.mxu0 0.0
    %255 = vmatpush1.msra.mxu0 0.0
    %256 = vmatprep.subr.mxu0 0.0
    %257 = vmatpush1.msra.mxu0 0.0
    %258 = vmatprep.subr.mxu0 0.0
    %259 = vmatpush1.msra.mxu0 0.0
    %260 = vmatprep.subr.mxu0 0.0
    %261 = vmatpush1.msra.mxu0 0.0
    %262 = vmatprep.subr.mxu0 0.0
    %263 = vmatpush1.msra.mxu0 0.0
    %264 = vmatprep.subr.mxu0 0.0
    %265 = vmatpush1.msra.mxu0 0.0
    %266 = vmatprep.subr.mxu0 0.0
    %267 = vmatpush1.msra.mxu0 0.0
    %268 = vmatprep.subr.mxu0 0.0
    %269 = vmatpush1.msra.mxu0 0.0
    %270 = vmatprep.subr.mxu0 0.0
    %271 = vmatpush1.msra.mxu0 0.0
    %272 = vmatprep.subr.mxu0 0.0
    %273 = vmatpush1.msra.mxu0 0.0
    %274 = vmatprep.subr.mxu0 0.0
    %275 = vmatpush1.msra.mxu0 0.0
    %276 = vmatprep.subr.mxu0 0.0
    %277 = vmatpush1.msra.mxu0 0.0
    %278 = vmatprep.subr.mxu0 0.0
    %279 = vmatpush1.msra.mxu0 0.0
    %280 = vmatprep.subr.mxu0 0.0
    %281 = vmatpush1.msra.mxu0 0.0
    %282 = vmatprep.subr.mxu0 0.0
    %283 = vmatpush1.msra.mxu0 0.0
    %284 = vmatprep.subr.mxu0 0.0
    %285 = vmatpush1.msra.mxu0 0.0
    %286 = vmatprep.subr.mxu0 0.0
    %287 = vmatpush1.msra.mxu0 0.0
    %288 = vmatprep.subr.mxu0 0.0
    %289 = vmatpush1.msra.mxu0 0.0
    %290 = vmatprep.subr.mxu0 0.0
    %291 = vmatpush1.msra.mxu0 0.0
    %292 = vmatprep.subr.mxu0 0.0
    %293 = vmatpush1.msra.mxu0 0.0
    %294 = vmatprep.subr.mxu0 0.0
    %295 = vmatpush1.msra.mxu0 0.0
    %296 = vmatprep.subr.mxu0 0.0
    %297 = vmatpush1.msra.mxu0 0.0
    %298 = vmatprep.subr.mxu0 0.0
    %299 = vmatpush1.msra.mxu0 0.0
    %300 = vmatprep.subr.mxu0 0.0
    %301 = vmatpush1.msra.mxu0 0.0
    %302 = vmatprep.subr.mxu0 0.0
    %303 = vmatpush1.msra.mxu0 0.0
    %304 = vmatprep.subr.mxu0 0.0
    %305 = vmatpush1.msra.mxu0 0.0
    %306 = vmatprep.subr.mxu0 0.0
    %307 = vmatpush1.msra.mxu0 0.0
    %308 = vmatprep.subr.mxu0 0.0
    %309 = vmatpush1.msra.mxu0 0.0
    %310 = vmatprep.subr.mxu0 0.0
    %311 = vmatpush1.msra.mxu0 0.0
    %312 = vmatprep.mubr.f32.mxu0 0.0
    %313 = vmatmul.mubr.f32.gmra.mrb[0].mxu0 %v243
    %v314 = vpop.f32.mrb[0].mxu0
    %v315 = vadd.f32 %v240, %v314
    %v316 = vpop.f32.mrb[0].mxu0
    %317 = vmatprep.mubr.f32.mxu0 0.0
    %318 = vmatmul.mubr.f32.gmra.mrb[0].mxu0 %v246
    %v319 = vpop.f32.mrb[0].mxu0
    %v320 = vadd.f32 %v240, %v319
    %v321 = vpop.f32.mrb[0].mxu0
    %322 = vdwg.mxu0
    %v323 = vmax.f32 %v315, 0.0
    %v324 = vmax.f32 %v320, 0.0
    %v325 = vld [vmem:[%s7] sm:$0xff]
    %v326 = vld [vmem:[%s7 + $0x8] sm:$0xff]
    %v327 = vld [vmem:[%s7 + $0x10] sm:$0xff]
    %v328 = vld [vmem:[%s7 + $0x18] sm:$0xff]
    %v329 = vld [vmem:[%s8] sm:$0x1]
    %v331 = vlaneseq
    %v332 = vshrl.u32 %v331, 7
    %v333 = vsub.s32 0, %v332
    %v334 = vrot.slane %v329, %v333
    %v337 = vsel %vm149, %v323, 0
    %v340 = vsel %vm149, %v324, 0
    %342 = vmatprep.subr.mxu0 0.0
    %343 = vmatpush1.msra.mxu0 %v325
    %344 = vmatprep.subr.mxu0 0.0
    %345 = vmatpush1.msra.mxu0 %v326
    %346 = vmatprep.subr.mxu0 0.0
    %347 = vmatpush1.msra.mxu0 %v327
    %348 = vmatprep.subr.mxu0 0.0
    %349 = vmatpush1.msra.mxu0 %v328
    %350 = vmatprep.subr.mxu0 0.0
    %351 = vmatpush1.msra.mxu0 0.0
    %352 = vmatprep.subr.mxu0 0.0
    %353 = vmatpush1.msra.mxu0 0.0
    %354 = vmatprep.subr.mxu0 0.0
    %355 = vmatpush1.msra.mxu0 0.0
    %356 = vmatprep.subr.mxu0 0.0
    %357 = vmatpush1.msra.mxu0 0.0
    %358 = vmatprep.subr.mxu0 0.0
    %359 = vmatpush1.msra.mxu0 0.0
    %360 = vmatprep.subr.mxu0 0.0
    %361 = vmatpush1.msra.mxu0 0.0
    %362 = vmatprep.subr.mxu0 0.0
    %363 = vmatpush1.msra.mxu0 0.0
    %364 = vmatprep.subr.mxu0 0.0
    %365 = vmatpush1.msra.mxu0 0.0
    %366 = vmatprep.subr.mxu0 0.0
    %367 = vmatpush1.msra.mxu0 0.0
    %368 = vmatprep.subr.mxu0 0.0
    %369 = vmatpush1.msra.mxu0 0.0
    %370 = vmatprep.subr.mxu0 0.0
    %371 = vmatpush1.msra.mxu0 0.0
    %372 = vmatprep.subr.mxu0 0.0
    %373 = vmatpush1.msra.mxu0 0.0
    %374 = vmatprep.subr.mxu0 0.0
    %375 = vmatpush1.msra.mxu0 0.0
    %376 = vmatprep.subr.mxu0 0.0
    %377 = vmatpush1.msra.mxu0 0.0
    %378 = vmatprep.subr.mxu0 0.0
    %379 = vmatpush1.msra.mxu0 0.0
    %380 = vmatprep.subr.mxu0 0.0
    %381 = vmatpush1.msra.mxu0 0.0
    %382 = vmatprep.subr.mxu0 0.0
    %383 = vmatpush1.msra.mxu0 0.0
    %384 = vmatprep.subr.mxu0 0.0
    %385 = vmatpush1.msra.mxu0 0.0
    %386 = vmatprep.subr.mxu0 0.0
    %387 = vmatpush1.msra.mxu0 0.0
    %388 = vmatprep.subr.mxu0 0.0
    %389 = vmatpush1.msra.mxu0 0.0
    %390 = vmatprep.subr.mxu0 0.0
    %391 = vmatpush1.msra.mxu0 0.0
    %392 = vmatprep.subr.mxu0 0.0
    %393 = vmatpush1.msra.mxu0 0.0
    %394 = vmatprep.subr.mxu0 0.0
    %395 = vmatpush1.msra.mxu0 0.0
    %396 = vmatprep.subr.mxu0 0.0
    %397 = vmatpush1.msra.mxu0 0.0
    %398 = vmatprep.subr.mxu0 0.0
    %399 = vmatpush1.msra.mxu0 0.0
    %400 = vmatprep.subr.mxu0 0.0
    %401 = vmatpush1.msra.mxu0 0.0
    %402 = vmatprep.subr.mxu0 0.0
    %403 = vmatpush1.msra.mxu0 0.0
    %404 = vmatprep.subr.mxu0 0.0
    %405 = vmatpush1.msra.mxu0 0.0
    %406 = vmatprep.mubr.f32.mxu0 0.0
    %407 = vmatmul.mubr.f32.gmra.mrb[0].mxu0 %v337
    %v408 = vpop.f32.mrb[0].mxu0
    %v409 = vadd.f32 %v334, %v408
    %v410 = vpop.f32.mrb[0].mxu0
    %411 = vmatprep.mubr.f32.mxu0 0.0
    %412 = vmatmul.mubr.f32.gmra.mrb[0].mxu0 %v340
    %v413 = vpop.f32.mrb[0].mxu0
    %v414 = vadd.f32 %v334, %v413
    %v415 = vpop.f32.mrb[0].mxu0
    %416 = vdwg.mxu0
    %v417 = vld [vmem:[%s9] sm:$0xff]
    %v418 = vld [vmem:[%s9 + $0x8] sm:$0xff]
    %v419 = vld [vmem:[%s9 + $0x10] sm:$0xff]
    %v420 = vld [vmem:[%s9 + $0x18] sm:$0xff]
    %v421 = vld [vmem:[%s10] sm:$0x1]
    %v423 = vlaneseq
    %v424 = vshrl.u32 %v423, 7
    %v425 = vsub.s32 0, %v424
    %v426 = vrot.slane %v421, %v425
    %428 = vrot.lane.b32.xlu0 %v323, 96
    %v429 = vpop.permute.xlu0 %428
    %430 = vrot.lane.b32.xlu0 %v324, 96
    %v431 = vpop.permute.xlu0 %430
    %v432 = vsel %vm149, %v429, 0
    %v434 = vsel %vm149, %v431, 0
    %436 = vmatprep.subr.mxu0 0.0
    %437 = vmatpush1.msra.mxu0 %v417
    %438 = vmatprep.subr.mxu0 0.0
    %439 = vmatpush1.msra.mxu0 %v418
    %440 = vmatprep.subr.mxu0 0.0
    %441 = vmatpush1.msra.mxu0 %v419
    %442 = vmatprep.subr.mxu0 0.0
    %443 = vmatpush1.msra.mxu0 %v420
    %444 = vmatprep.subr.mxu0 0.0
    %445 = vmatpush1.msra.mxu0 0.0
    %446 = vmatprep.subr.mxu0 0.0
    %447 = vmatpush1.msra.mxu0 0.0
    %448 = vmatprep.subr.mxu0 0.0
    %449 = vmatpush1.msra.mxu0 0.0
    %450 = vmatprep.subr.mxu0 0.0
    %451 = vmatpush1.msra.mxu0 0.0
    %452 = vmatprep.subr.mxu0 0.0
    %453 = vmatpush1.msra.mxu0 0.0
    %454 = vmatprep.subr.mxu0 0.0
    %455 = vmatpush1.msra.mxu0 0.0
    %456 = vmatprep.subr.mxu0 0.0
    %457 = vmatpush1.msra.mxu0 0.0
    %458 = vmatprep.subr.mxu0 0.0
    %459 = vmatpush1.msra.mxu0 0.0
    %460 = vmatprep.subr.mxu0 0.0
    %461 = vmatpush1.msra.mxu0 0.0
    %462 = vmatprep.subr.mxu0 0.0
    %463 = vmatpush1.msra.mxu0 0.0
    %464 = vmatprep.subr.mxu0 0.0
    %465 = vmatpush1.msra.mxu0 0.0
    %466 = vmatprep.subr.mxu0 0.0
    %467 = vmatpush1.msra.mxu0 0.0
    %468 = vmatprep.subr.mxu0 0.0
    %469 = vmatpush1.msra.mxu0 0.0
    %470 = vmatprep.subr.mxu0 0.0
    %471 = vmatpush1.msra.mxu0 0.0
    %472 = vmatprep.subr.mxu0 0.0
    %473 = vmatpush1.msra.mxu0 0.0
    %474 = vmatprep.subr.mxu0 0.0
    %475 = vmatpush1.msra.mxu0 0.0
    %476 = vmatprep.subr.mxu0 0.0
    %477 = vmatpush1.msra.mxu0 0.0
    %478 = vmatprep.subr.mxu0 0.0
    %479 = vmatpush1.msra.mxu0 0.0
    %480 = vmatprep.subr.mxu0 0.0
    %481 = vmatpush1.msra.mxu0 0.0
    %482 = vmatprep.subr.mxu0 0.0
    %483 = vmatpush1.msra.mxu0 0.0
    %484 = vmatprep.subr.mxu0 0.0
    %485 = vmatpush1.msra.mxu0 0.0
    %486 = vmatprep.subr.mxu0 0.0
    %487 = vmatpush1.msra.mxu0 0.0
    %488 = vmatprep.subr.mxu0 0.0
    %489 = vmatpush1.msra.mxu0 0.0
    %490 = vmatprep.subr.mxu0 0.0
    %491 = vmatpush1.msra.mxu0 0.0
    %492 = vmatprep.subr.mxu0 0.0
    %493 = vmatpush1.msra.mxu0 0.0
    %494 = vmatprep.subr.mxu0 0.0
    %495 = vmatpush1.msra.mxu0 0.0
    %496 = vmatprep.subr.mxu0 0.0
    %497 = vmatpush1.msra.mxu0 0.0
    %498 = vmatprep.subr.mxu0 0.0
    %499 = vmatpush1.msra.mxu0 0.0
    %500 = vmatprep.mubr.f32.mxu0 0.0
    %501 = vmatmul.mubr.f32.gmra.mrb[0].mxu0 %v432
    %v502 = vpop.f32.mrb[0].mxu0
    %v503 = vadd.f32 %v426, %v502
    %v504 = vpop.f32.mrb[0].mxu0
    %505 = vmatprep.mubr.f32.mxu0 0.0
    %506 = vmatmul.mubr.f32.gmra.mrb[0].mxu0 %v434
    %v507 = vpop.f32.mrb[0].mxu0
    %v508 = vadd.f32 %v426, %v507
    %v509 = vpop.f32.mrb[0].mxu0
    %510 = vdwg.mxu0
    %v511 = vxor.u32 %v409, 2147483648
    %v512 = vxor.u32 %v414, 2147483648
    %v513 = vmul.f32 %v511, 1.442695
    %v514 = vpow.pop %v513
    %v515 = vmul.f32 %v512, 1.442695
    %v516 = vpow.pop %v515
    %v517 = vadd.f32 %v514, 1.0
    %v518 = vadd.f32 %v516, 1.0
    %v519 = vrcp.pop %v517
    %v520 = vmul.f32 1.0, %v519
    %v521 = vrcp.pop %v518
    %v522 = vmul.f32 1.0, %v521
    %v523 = vsub.f32 %v520, 0.5
    %v524 = vsub.f32 %v522, 0.5
    %v525 = vmul.f32 %v523, 0.4
    %v526 = vmul.f32 %v524, 0.4
    %v527 = vmul.f32 %v525, 1.442695
    %v528 = vpow.pop %v527
    %v529 = vmul.f32 %v526, 1.442695
    %v530 = vpow.pop %v529
    %v533 = vmul.f32 %v528, %v53
    %v534 = vmul.f32 %v530, %v55
    %v535 = vadd.f32 %v533, %v503
    %v536 = vadd.f32 %v534, %v508
    %539 = vrot.lane.b32.xlu0 %v535, 16
    %v540 = vpop.permute.xlu0 %539
    %541 = vrot.lane.b32.xlu0 %v536, 16
    %v542 = vpop.permute.xlu0 %541
    %v545 = vsel %vm56, %v231, %v540
    %v546 = vsel %vm56, %v232, %v542
    %v547 = vsel %vm149, %v545, 0.0
    %v548 = vsel %vm149, %v546, 0.0
    %549 = vst [vmem:[#allocation2] sm:$0xff] %v547
    %550 = vst [vmem:[#allocation2 + $0x8] sm:$0xff] %v548
    // Predicated region
    $region46: #{tpu_custom_call.1} parent=1 // pred_check
      _
    $region47: #{tpu_custom_call.1} parent=1 // pred_check_branch
      %552 = sbr.rel (0) target = $region49
    $region48: #{tpu_custom_call.1} parent=1 // pred_region
      %s554 = ssub.s32 256, 256
      %555 = vsyncadd [#allocation3], %s554
      %s556 = sshll.u32 [#allocation2], 4
      %s557 = int_to_ptr.vmem [resolvable:$true] %s556
      %562 = dma.vmem_to_hbm [thread:$0]  %s557, 256, %s11, [#allocation3], 128, 128, 8
    $region49: #{tpu_custom_call.1} parent=1 // pred_fallthru
      _
    // Predicated region
    $region50: #{tpu_custom_call.1} parent=1 // pred_check
      _
    $region51: #{tpu_custom_call.1} parent=1 // pred_check_branch
      %564 = sbr.rel (0) target = $region53
    $region52: #{tpu_custom_call.1} parent=1 // pred_region
      %565 = dma.done [#allocation3], 256
    $region53: #{tpu_custom_call.1} parent=1 // pred_fallthru
      _
    %566 = vsyncpa [#allocation3], 1

</llo_original>
